<compile_context>
chip_gen: v7x
topology: tpu7x:2x2x1
jax: 0.10.0
libtpu: 0.0.40
codegen_flags: <defaults>
</compile_context>

<pallas_src>
import functools

import jax
import jax.numpy as jnp
from jax import lax
from jax.experimental import pallas as pl
from jax.experimental.pallas import tpu as pltpu

_NEG_BIG = -1e30          # "minus infinity" stand-in that never yields inf - inf
_TINY = 1e-30             # clamp so log(m) / log(S) stay finite on underflow
_TARGET_ELEMS = 512 * 1024   # ~0.5M elements / tile: step overhead << EUP time


# ---------------------------------------------------------------------------
# Kernels
# ---------------------------------------------------------------------------

def _jsd_fullrow_kernel(x_ref, y_ref, o_ref, acc_ref, *,
                        temperature, tb, batch, n_steps, need_row_mask):
    """Full-row-softmax path: one (tb, C) tile of both logits per grid step.

    grid = (n_splits, n_steps):
      axis 0 : independent batch chunks (megacore split, "parallel").
      axis 1 : serial reduction over the chunk's row blocks ("arbitrary").
    """
    s = pl.program_id(0)
    i = pl.program_id(1)

    @pl.when(i == 0)
    def _():
        acc_ref[...] = jnp.zeros_like(acc_ref)

    x = x_ref[...].astype(jnp.float32)
    y = y_ref[...].astype(jnp.float32)
    if temperature != 1.0:       # trace-time check: skip two full-tile muls at T=1
        inv_t = jnp.float32(1.0 / temperature)
        x = x * inv_t
        y = y * inv_t

    def softmax_and_logsoftmax(z):
        zm = z - jnp.max(z, axis=1, keepdims=True)
        e = jnp.exp(zm)                          # EUP: 1 exp / element
        ssum = jnp.sum(e, axis=1, keepdims=True)
        p = e / ssum                             # exact per-row divide (not the bottleneck)
        log_p = zm - jnp.log(ssum)               # analytic log-softmax (finite)
        return p, log_p

    p, log_p = softmax_and_logsoftmax(x)
    q, log_q = softmax_and_logsoftmax(y)
    m = 0.5 * (p + q)
    # Clamp avoids log(0) -> -inf (then 0 * -inf = NaN) if both p and q underflow;
    # the true limit of the term there is 0, which the clamp reproduces.
    log_m = jnp.log(jnp.maximum(m, _TINY))       # EUP: 1 log / element
    term = m * (2.0 * log_m - log_p - log_q)

    if need_row_mask:                            # tail-row mask (pure VPU, free)
        rows = (s * n_steps + i) * tb + lax.broadcasted_iota(
            jnp.int32, term.shape, 0)
        term = jnp.where(rows < batch, term, 0.0)

    c = term.shape[1]
    # (8, C) partial-sum slab: pure VPU adds per step; the single cross-lane
    # reduce happens only in the last-step pl.when below.
    acc_ref[...] += term.reshape(tb // 8, 8, c).sum(axis=0)

    @pl.when(i == n_steps - 1)
    def _():
        o_ref[...] = jnp.sum(acc_ref[...]).reshape(1, 1, 1)


def _jsd_stats_kernel(x_ref, y_ref, stats_ref, *,
                      temperature, tb, tc, batch, classes, n_b):
    """Pass 1 of the tiled-C path: online per-row (max, sum-exp) for both logits.

    stats layout per row: [max_x, sumexp_x, max_y, sumexp_y]; the (tb, 4)
    output block is resident across the C axis and written back once per row
    block.
    """
    s = pl.program_id(0)
    i = pl.program_id(1)
    c = pl.program_id(2)

    @pl.when(c == 0)
    def _():
        col = lax.broadcasted_iota(jnp.int32, (tb, 4), 1)
        stats_ref[...] = jnp.where(col % 2 == 0, _NEG_BIG, 0.0).astype(jnp.float32)

    x = x_ref[...].astype(jnp.float32)
    y = y_ref[...].astype(jnp.float32)
    if temperature != 1.0:
        inv_t = jnp.float32(1.0 / temperature)
        x = x * inv_t
        y = y * inv_t

    rows = (s * n_b + i) * tb + lax.broadcasted_iota(jnp.int32, (tb, tc), 0)
    cols = c * tc + lax.broadcasted_iota(jnp.int32, (tb, tc), 1)
    mask = (rows < batch) & (cols < classes)
    x = jnp.where(mask, x, _NEG_BIG)             # masked cols/rows contribute exp() = 0
    y = jnp.where(mask, y, _NEG_BIG)

    st = stats_ref[...]

    def update(z, m_old, s_old):
        m_new = jnp.maximum(m_old, jnp.max(z, axis=1, keepdims=True))
        s_new = (s_old * jnp.exp(m_old - m_new)
                 + jnp.sum(jnp.exp(z - m_new), axis=1, keepdims=True))
        return m_new, s_new

    mx, sx = update(x, st[:, 0:1], st[:, 1:2])
    my, sy = update(y, st[:, 2:3], st[:, 3:4])
    stats_ref[:, 0:1] = mx
    stats_ref[:, 1:2] = sx
    stats_ref[:, 2:3] = my
    stats_ref[:, 3:4] = sy


def _jsd_term_kernel(stats_ref, x_ref, y_ref, o_ref, acc_ref, *,
                     temperature, tb, tc, batch, classes, n_b, n_c):
    """Pass 2 of the tiled-C path: JSD term from (tb, tc) blocks + row stats."""
    s = pl.program_id(0)
    i = pl.program_id(1)
    c = pl.program_id(2)

    @pl.when((i == 0) & (c == 0))
    def _():
        acc_ref[...] = jnp.zeros_like(acc_ref)

    x = x_ref[...].astype(jnp.float32)
    y = y_ref[...].astype(jnp.float32)
    if temperature != 1.0:
        inv_t = jnp.float32(1.0 / temperature)
        x = x * inv_t
        y = y * inv_t

    rows = (s * n_b + i) * tb + lax.broadcasted_iota(jnp.int32, (tb, tc), 0)
    cols = c * tc + lax.broadcasted_iota(jnp.int32, (tb, tc), 1)
    mask = (rows < batch) & (cols < classes)
    x = jnp.where(mask, x, 0.0)
    y = jnp.where(mask, y, 0.0)

    st = stats_ref[...]
    log_sx = jnp.log(jnp.maximum(st[:, 1:2], _TINY))
    log_sy = jnp.log(jnp.maximum(st[:, 3:4], _TINY))

    log_p = (x - st[:, 0:1]) - log_sx            # analytic log-softmax
    log_q = (y - st[:, 2:3]) - log_sy
    p = jnp.exp(log_p)                           # EUP: 1 exp / element
    q = jnp.exp(log_q)
    m = 0.5 * (p + q)
    log_m = jnp.log(jnp.maximum(m, _TINY))       # EUP: 1 log / element
    term = m * (2.0 * log_m - log_p - log_q)
    term = jnp.where(mask, term, 0.0)            # zero tail rows / cols (VPU, free)

    acc_ref[...] += term.reshape(tb // 8, 8, tc).sum(axis=0)

    @pl.when((i == n_b - 1) & (c == n_c - 1))
    def _():
        o_ref[...] = jnp.sum(acc_ref[...]).reshape(1, 1, 1)


# ---------------------------------------------------------------------------
# Planning / wrappers
# ---------------------------------------------------------------------------

def _tpu_info():
    """(vmem_capacity_bytes, tensorcore_count) with conservative fallbacks."""
    vmem = 64 * 1024 * 1024          # assume the smallest (v7x per-TC) VMEM
    cores = 1
    try:
        info = pltpu.get_tpu_info()
        vmem = int(getattr(info, "vmem_capacity_bytes", vmem))
        for attr in ("num_cores", "core_count", "tensorcore_count",
                     "num_tensorcores"):
            val = getattr(info, attr, None)
            if val:
                cores = int(val)
                break
    except Exception:
        pass
    return vmem, max(1, min(cores, 8))


def _round_up(n, m):
    return ((n + m - 1) // m) * m


def _grid_semantics(n_splits, n_inner_axes):
    lead = "parallel" if n_splits > 1 else "arbitrary"
    return (lead,) + ("arbitrary",) * n_inner_axes


def _plan(B, C, itemsize, max_rows_per_step, max_cols_per_step):
    vmem_cap, num_cores = _tpu_info()
    vmem_limit = int(min(vmem_cap * 3 // 4, 100 * 1024 * 1024))
    budget = (vmem_limit * 3) // 5       # tiles + f32 temporaries; rest is headroom

    # Megacore split: only as many ways as there are TensorCores, and only if
    # each split gets at least one 8-row block (v5e/v6e -> 1, v7x -> 2).
    n_splits = 1
    if num_cores > 1:
        n_splits = max(1, min(num_cores, B // 8))
    rows_per_split = pl.cdiv(B, n_splits)

    # ---------------- full-row candidate (softmax over the whole row) -------
    per_row_full = C * (4 * itemsize + 7 * 4)    # 2 dbl-buffered inputs + f32 temps
    tb_vmem = budget // max(per_row_full, 1)
    full_row_ok = (max_cols_per_step is None or max_cols_per_step >= C)
    full_row_ok = full_row_ok and tb_vmem >= min(64, _round_up(rows_per_split, 8))

    if full_row_ok:
        tb = min(tb_vmem,
                 _round_up(max(_TARGET_ELEMS // max(C, 1), 1), 8),
                 _round_up(rows_per_split, 8))
        if max_rows_per_step is not None:
            tb = min(tb, _round_up(max_rows_per_step, 8))
        tb = max(8, (tb // 8) * 8)
        n_blocks = pl.cdiv(B, tb)
        n_steps = pl.cdiv(n_blocks, n_splits)
        return dict(kind="full", n_splits=n_splits, tb=tb, n_steps=n_steps,
                    n_blocks=n_blocks, vmem_limit=vmem_limit)

    # ---------------- tiled-C, two-pass (online row stats + term pass) ------
    tb = 256                                     # keep >= 256 rows even at huge C
    if max_rows_per_step is not None:
        tb = min(tb, _round_up(max_rows_per_step, 8))
    tb = min(tb, _round_up(rows_per_split, 8))
    tb = max(8, (tb // 8) * 8)

    per_elem = 4 * itemsize + 10 * 4             # dbl-buffered inputs + f32 temps
    tc = min(budget // max(tb * per_elem, 1),
             max(_TARGET_ELEMS // tb, 128),
             _round_up(C, 128))
    if max_cols_per_step is not None:
        tc = min(tc, max(128, (max_cols_per_step // 128) * 128))
    tc = max(128, (tc // 128) * 128)

    n_blocks = pl.cdiv(B, tb)
    n_steps = pl.cdiv(n_blocks, n_splits)
    n_c = pl.cdiv(C, tc)
    return dict(kind="tiled", n_splits=n_splits, tb=tb, tc=tc, n_steps=n_steps,
                n_blocks=n_blocks, n_c=n_c, vmem_limit=vmem_limit)


def _jsd_fullrow_call(inp, tgt, temperature, plan):
    B, C = inp.shape
    n_splits, tb, n_steps = plan["n_splits"], plan["tb"], plan["n_steps"]
    last_block = plan["n_blocks"] - 1
    need_row_mask = n_splits * n_steps * tb > B

    def in_map(s, i):
        # Clamp so an overshoot (fully masked) block never DMAs out of bounds.
        return (jnp.minimum(s * n_steps + i, last_block), 0)

    return pl.pallas_call(
        functools.partial(_jsd_fullrow_kernel, temperature=float(temperature),
                          tb=tb, batch=B, n_steps=n_steps,
                          need_row_mask=need_row_mask),
        out_shape=jax.ShapeDtypeStruct((n_splits, 1, 1), jnp.float32),
        grid_spec=pltpu.PrefetchScalarGridSpec(
            num_scalar_prefetch=0,
            grid=(n_splits, n_steps),
            in_specs=[pl.BlockSpec((tb, C), in_map),
                      pl.BlockSpec((tb, C), in_map)],
            out_specs=pl.BlockSpec((1, 1, 1), lambda s, i: (s, 0, 0)),
            scratch_shapes=[pltpu.VMEM((8, C), jnp.float32)],
        ),
        compiler_params=pltpu.CompilerParams(
            dimension_semantics=_grid_semantics(n_splits, 1),
            vmem_limit_bytes=plan["vmem_limit"]),
    )(inp, tgt)


def _jsd_tiled_call(inp, tgt, temperature, plan):
    B, C = inp.shape
    n_splits, tb, tc = plan["n_splits"], plan["tb"], plan["tc"]
    n_b, n_c = plan["n_steps"], plan["n_c"]
    last_block = plan["n_blocks"] - 1
    cparams = pltpu.CompilerParams(
        dimension_semantics=_grid_semantics(n_splits, 2),
        vmem_limit_bytes=plan["vmem_limit"])

    def xy_map(s, i, c):
        # Clamp so an overshoot (fully masked) block never DMAs out of bounds.
        return (jnp.minimum(s * n_b + i, last_block), c)

    def stats_map(s, i, c):
        return (s * n_b + i, 0)

    stats_rows = n_splits * n_b * tb   # padded; rows >= B are masked in pass 2

    stats = pl.pallas_call(
        functools.partial(_jsd_stats_kernel, temperature=float(temperature),
                          tb=tb, tc=tc, batch=B, classes=C, n_b=n_b),
        out_shape=jax.ShapeDtypeStruct((stats_rows, 4), jnp.float32),
        grid_spec=pltpu.PrefetchScalarGridSpec(
            num_scalar_prefetch=0,
            grid=(n_splits, n_b, n_c),
            in_specs=[pl.BlockSpec((tb, tc), xy_map),
                      pl.BlockSpec((tb, tc), xy_map)],
            out_specs=pl.BlockSpec((tb, 4), stats_map),
        ),
        compiler_params=cparams,
    )(inp, tgt)

    return pl.pallas_call(
        functools.partial(_jsd_term_kernel, temperature=float(temperature),
                          tb=tb, tc=tc, batch=B, classes=C, n_b=n_b, n_c=n_c),
        out_shape=jax.ShapeDtypeStruct((n_splits, 1, 1), jnp.float32),
        grid_spec=pltpu.PrefetchScalarGridSpec(
            num_scalar_prefetch=0,
            grid=(n_splits, n_b, n_c),
            in_specs=[pl.BlockSpec((tb, 4), stats_map),
                      pl.BlockSpec((tb, tc), xy_map),
                      pl.BlockSpec((tb, tc), xy_map)],
            out_specs=pl.BlockSpec((1, 1, 1), lambda s, i, c: (s, 0, 0)),
            scratch_shapes=[pltpu.VMEM((8, tc), jnp.float32)],
        ),
        compiler_params=cparams,
    )(stats, inp, tgt)


def jsd_loss(inp, tgt, *, temperature=1.0,
             max_rows_per_step=None, max_cols_per_step=None):
    """JSD loss, reduction='batchmean'.  inp/tgt: (B, C) logits (f32 or bf16).

    Prefer passing bf16 logits: they are cast to f32 in-kernel (math is
    unchanged) while HBM traffic and the VMEM tile budget are halved.
    """
    assert inp.ndim == 2, f"wrong input shape {inp.shape}"
    assert inp.shape == tgt.shape, (
        f"input {inp.shape} and target {tgt.shape} mismatch")
    B, C = inp.shape

    plan = _plan(B, C, jnp.dtype(inp.dtype).itemsize,
                 max_rows_per_step, max_cols_per_step)
    if plan["kind"] == "full":
        partials = _jsd_fullrow_call(inp, tgt, temperature, plan)
    else:
        partials = _jsd_tiled_call(inp, tgt, temperature, plan)

    # batchmean uses the true batch size, never the padded grid extent.
    scale = jnp.float32(temperature * temperature / (2.0 * B))
    return jnp.sum(partials) * scale


def _jsd_loss_ref(inp, tgt, temperature=1.0):
    """Pure-JAX reference mirroring the PyTorch module."""
    x = inp.astype(jnp.float32) / temperature
    y = tgt.astype(jnp.float32) / temperature
    p = jax.nn.softmax(x, axis=1)
    q = jax.nn.softmax(y, axis=1)
    m = 0.5 * (p + q)
    B = inp.shape[0]
    kl1 = jnp.sum(m * (jnp.log(m) - jnp.log(p))) / B * temperature ** 2
    kl2 = jnp.sum(m * (jnp.log(m) - jnp.log(q))) / B * temperature ** 2
    return (kl1 + kl2) / 2.0


if __name__ == "__main__":
    key = jax.random.PRNGKey(0)
    k1, k2, k3, k4, k5, k6 = jax.random.split(key, 6)
    temperature = 2.0

    # 1) Full-row path, multi-step accumulator (8-row tiles forced by the cap).
    x1 = jax.random.normal(k1, (32, 128), dtype=jnp.float32)
    y1 = jax.random.normal(k2, (32, 128), dtype=jnp.float32)
    out1 = jax.block_until_ready(
        jsd_loss(x1, y1, temperature=temperature, max_rows_per_step=8))
    ref1 = _jsd_loss_ref(x1, y1, temperature)
    assert jnp.allclose(out1, ref1, rtol=2e-5, atol=1e-6), (out1, ref1)

    # 2) Full-row path, ragged batch (B not a multiple of 8) -> tail-row mask.
    x2 = jax.random.normal(k3, (20, 160), dtype=jnp.float32)
    y2 = jax.random.normal(k4, (20, 160), dtype=jnp.float32)
    out2 = jax.block_until_ready(jsd_loss(x2, y2, temperature=1.0))
    ref2 = _jsd_loss_ref(x2, y2, 1.0)
    assert jnp.allclose(out2, ref2, rtol=2e-5, atol=1e-6), (out2, ref2)

    # 3) Tiled-C two-pass path (forced via small column tiles), bf16 logits at
    #    the HBM boundary, ragged C coverage handled by the column mask.
    x3 = jax.random.normal(k5, (24, 384), dtype=jnp.float32).astype(jnp.bfloat16)
    y3 = jax.random.normal(k6, (24, 384), dtype=jnp.float32).astype(jnp.bfloat16)
    out3 = jax.block_until_ready(
        jsd_loss(x3, y3, temperature=temperature,
                 max_rows_per_step=8, max_cols_per_step=128))
    ref3 = _jsd_loss_ref(x3, y3, temperature)
    assert jnp.allclose(out3, ref3, rtol=2e-5, atol=1e-6), (out3, ref3)

    print("KERNEL_OK")
</pallas_src>

<mosaic_0001>
module attributes {stable_mosaic.version = 11 : i64} {
  func.func @_jsd_fullrow_kernel(%arg0: i32, %arg1: i32, %arg2: memref<8x128xf32, #tpu.memory_space<vmem>>, %arg3: memref<8x128xf32, #tpu.memory_space<vmem>>, %arg4: memref<1x1x1xf32, #tpu.memory_space<vmem>>, %arg5: memref<8x128xf32, #tpu.memory_space<vmem>>) attributes {dimension_semantics = [#tpu.dimension_semantics<arbitrary>, #tpu.dimension_semantics<arbitrary>], iteration_bounds = array<i64: 1, 4>, scalar_prefetch = 0 : i64, scratch_operands = 1 : i64, tpu.core_type = #tpu.core_type<tc>, window_params = [{transform_indices = @transform_0, window_bounds = array<i64: 8, 128>}, {transform_indices = @transform_1, window_bounds = array<i64: 8, 128>}, {transform_indices = @transform_2, window_bounds = array<i64: 1, 1, 1>}]} {
    %c0_i32 = arith.constant 0 : i32
    %0 = arith.cmpi eq, %arg1, %c0_i32 : i32
    %1 = arith.extui %0 : i1 to i32
    %c0_i32_0 = arith.constant 0 : i32
    %2 = arith.cmpi ne, %1, %c0_i32_0 : i32
    scf.if %2 {
      %cst_18 = arith.constant 0.000000e+00 : f32
      %52 = vector.broadcast %cst_18 : f32 to vector<8x128xf32>
      %c0_19 = arith.constant 0 : index
      %c0_20 = arith.constant 0 : index
      %53 = vector.load %arg5[%c0_19, %c0_20] : memref<8x128xf32, #tpu.memory_space<vmem>>, vector<8x128xf32>
      tpu.vector_store %arg5[%c0_19, %c0_20], %52 {strides = array<i32>} : memref<8x128xf32, #tpu.memory_space<vmem>>, vector<8x128xf32>,
    } else {
    }
    %c0 = arith.constant 0 : index
    %c0_1 = arith.constant 0 : index
    %3 = vector.load %arg2[%c0, %c0_1] : memref<8x128xf32, #tpu.memory_space<vmem>>, vector<8x128xf32>
    %c0_2 = arith.constant 0 : index
    %c0_3 = arith.constant 0 : index
    %4 = vector.load %arg3[%c0_2, %c0_3] : memref<8x128xf32, #tpu.memory_space<vmem>>, vector<8x128xf32>
    %cst = arith.constant 5.000000e-01 : f32
    %5 = vector.broadcast %cst : f32 to vector<8x128xf32>
    %6 = arith.mulf %3, %5 : vector<8x128xf32>
    %cst_4 = arith.constant 5.000000e-01 : f32
    %7 = vector.broadcast %cst_4 : f32 to vector<8x128xf32>
    %8 = arith.mulf %4, %7 : vector<8x128xf32>
    %cst_5 = arith.constant dense<0xFF800000> : vector<8xf32>
    %9 = vector.multi_reduction <maximumf>, %6, %cst_5 [1] : vector<8x128xf32> to vector<8xf32>
    %10 = vector.shape_cast %9 : vector<8xf32> to vector<8x1xf32>
    %11 = vector.broadcast %10 : vector<8x1xf32> to vector<8x128xf32>
    %12 = arith.subf %6, %11 : vector<8x128xf32>
    %13 = math.exp %12 : vector<8x128xf32>
    %cst_6 = arith.constant dense<0.000000e+00> : vector<8xf32>
    %14 = vector.multi_reduction <add>, %13, %cst_6 [1] : vector<8x128xf32> to vector<8xf32>
    %15 = vector.shape_cast %14 : vector<8xf32> to vector<8x1xf32>
    %16 = vector.broadcast %15 : vector<8x1xf32> to vector<8x128xf32>
    %17 = arith.divf %13, %16 : vector<8x128xf32>
    %18 = math.log %15 : vector<8x1xf32>
    %19 = vector.broadcast %18 : vector<8x1xf32> to vector<8x128xf32>
    %20 = arith.subf %12, %19 : vector<8x128xf32>
    %cst_7 = arith.constant dense<0xFF800000> : vector<8xf32>
    %21 = vector.multi_reduction <maximumf>, %8, %cst_7 [1] : vector<8x128xf32> to vector<8xf32>
    %22 = vector.shape_cast %21 : vector<8xf32> to vector<8x1xf32>
    %23 = vector.broadcast %22 : vector<8x1xf32> to vector<8x128xf32>
    %24 = arith.subf %8, %23 : vector<8x128xf32>
    %25 = math.exp %24 : vector<8x128xf32>
    %cst_8 = arith.constant dense<0.000000e+00> : vector<8xf32>
    %26 = vector.multi_reduction <add>, %25, %cst_8 [1] : vector<8x128xf32> to vector<8xf32>
    %27 = vector.shape_cast %26 : vector<8xf32> to vector<8x1xf32>
    %28 = vector.broadcast %27 : vector<8x1xf32> to vector<8x128xf32>
    %29 = arith.divf %25, %28 : vector<8x128xf32>
    %30 = math.log %27 : vector<8x1xf32>
    %31 = vector.broadcast %30 : vector<8x1xf32> to vector<8x128xf32>
    %32 = arith.subf %24, %31 : vector<8x128xf32>
    %33 = arith.addf %17, %29 : vector<8x128xf32>
    %cst_9 = arith.constant 5.000000e-01 : f32
    %34 = vector.broadcast %cst_9 : f32 to vector<8x128xf32>
    %35 = arith.mulf %34, %33 : vector<8x128xf32>
    %cst_10 = arith.constant 1.000000e-30 : f32
    %36 = vector.broadcast %cst_10 : f32 to vector<8x128xf32>
    %37 = arith.maximumf %35, %36 : vector<8x128xf32>
    %38 = math.log %37 : vector<8x128xf32>
    %cst_11 = arith.constant 2.000000e+00 : f32
    %39 = vector.broadcast %cst_11 : f32 to vector<8x128xf32>
    %40 = arith.mulf %39, %38 : vector<8x128xf32>
    %41 = arith.subf %40, %20 : vector<8x128xf32>
    %42 = arith.subf %41, %32 : vector<8x128xf32>
    %43 = arith.mulf %35, %42 : vector<8x128xf32>
    %c0_12 = arith.constant 0 : index
    %c0_13 = arith.constant 0 : index
    %44 = vector.load %arg5[%c0_12, %c0_13] : memref<8x128xf32, #tpu.memory_space<vmem>>, vector<8x128xf32>
    %45 = vector.shape_cast %43 : vector<8x128xf32> to vector<1x8x128xf32>
    %cst_14 = arith.constant dense<0.000000e+00> : vector<8x128xf32>
    %46 = vector.multi_reduction <add>, %45, %cst_14 [0] : vector<1x8x128xf32> to vector<8x128xf32>
    %47 = arith.addf %44, %46 : vector<8x128xf32>
    %c0_15 = arith.constant 0 : index
    %c0_16 = arith.constant 0 : index
    %48 = vector.load %arg5[%c0_15, %c0_16] : memref<8x128xf32, #tpu.memory_space<vmem>>, vector<8x128xf32>
    tpu.vector_store %arg5[%c0_15, %c0_16], %47 {strides = array<i32>} : memref<8x128xf32, #tpu.memory_space<vmem>>, vector<8x128xf32>,
    %c3_i32 = arith.constant 3 : i32
    %49 = arith.cmpi eq, %arg1, %c3_i32 : i32
    %50 = arith.extui %49 : i1 to i32
    %c0_i32_17 = arith.constant 0 : i32
    %51 = arith.cmpi ne, %50, %c0_i32_17 : i32
    scf.if %51 {
      %c0_18 = arith.constant 0 : index
      %c0_19 = arith.constant 0 : index
      %52 = vector.load %arg5[%c0_18, %c0_19] : memref<8x128xf32, #tpu.memory_space<vmem>>, vector<8x128xf32>
      %53 = vector.shape_cast %52 : vector<8x128xf32> to vector<1x8x128xf32>
      %cst_20 = arith.constant dense<0.000000e+00> : vector<1xf32>
      %54 = vector.multi_reduction <add>, %53, %cst_20 [1, 2] : vector<1x8x128xf32> to vector<1xf32>
      %55 = vector.shape_cast %54 : vector<1xf32> to vector<1x1x1xf32>
      %56 = vector.extract %55[0, 0, 0] : f32 from vector<1x1x1xf32>
      %57 = vector.broadcast %56 : f32 to vector<1x1x1xf32>
      %c0_21 = arith.constant 0 : index
      %c0_22 = arith.constant 0 : index
      %c0_23 = arith.constant 0 : index
      %58 = vector.load %arg4[%c0_21, %c0_22, %c0_23] : memref<1x1x1xf32, #tpu.memory_space<vmem>>, vector<1x1x1xf32>
      tpu.vector_store %arg4[%c0_21, %c0_22, %c0_23], %57 {strides = array<i32>} : memref<1x1x1xf32, #tpu.memory_space<vmem>>, vector<1x1x1xf32>,
    } else {
    }
    return
  }
  func.func @transform_0(%arg0: i32, %arg1: i32) -> (i32, i32) {
    %c4_i32 = arith.constant 4 : i32
    %0 = arith.muli %arg0, %c4_i32 : i32
    %1 = arith.addi %0, %arg1 : i32
    %c3_i32 = arith.constant 3 : i32
    %2 = arith.minsi %1, %c3_i32 : i32
    %c0_i32 = arith.constant 0 : i32
    %c0_i32_0 = arith.constant 0 : i32
    return %2, %c0_i32 : i32, i32
  }
  func.func @transform_1(%arg0: i32, %arg1: i32) -> (i32, i32) {
    %c4_i32 = arith.constant 4 : i32
    %0 = arith.muli %arg0, %c4_i32 : i32
    %1 = arith.addi %0, %arg1 : i32
    %c3_i32 = arith.constant 3 : i32
    %2 = arith.minsi %1, %c3_i32 : i32
    %c0_i32 = arith.constant 0 : i32
    %c0_i32_0 = arith.constant 0 : i32
    return %2, %c0_i32 : i32, i32
  }
  func.func @transform_2(%arg0: i32, %arg1: i32) -> (i32, i32, i32) {
    %c0_i32 = arith.constant 0 : i32
    %c0_i32_0 = arith.constant 0 : i32
    %c0_i32_1 = arith.constant 0 : i32
    return %arg0, %c0_i32, %c0_i32_0 : i32, i32, i32
  }
}

</mosaic_0001>

<llo_original>
// kernel: tpu_custom_call.1
$region0: #{tpu_custom_call.1}
  #allocation0 [shape = 'u32[]', space=smem, size = 0x4, offset = 0x4, fixed_abs, tag = 'smem constant byte address 0x4 - core index']
  #allocation1 [shape = 'u32[144,128]{1,0:T(1,128)}', space=vmem, size = 0x12000, scoped, tag = 'internal scratch']
  #allocation2 [shape = 'f32[8,128]{1,0:T(8,128)}', space=vmem, size = 0x1000, scoped, tag = 'scratch operand']
  %s0 = inlined_call_operand.hbm [shape: f32[32,128], index: 0, kind: input, shape index: {}]
  %s1 = inlined_call_operand.hbm [shape: f32[32,128], index: 1, kind: input, shape index: {}]
  %s2 = inlined_call_operand.hbm [shape: f32[1,1,1], index: 2, kind: output, shape index: {}]
  %s3 = sld [smem:[#allocation0]]
  $region57: #{tpu_custom_call.1} parent=0
    _
  %s5 = ssub.s32 1, %s3
  %s6 = scalar_select 0, %s5, %s3
  $region1: #{tpu_custom_call.1} parent=0
    #allocation3 [shape = 'u8[8192]{0}', space=vmem, size = 0x2000, scoped, tag = 'input window, operand 0']
    #allocation4 [shape = 's32[2]{0}', space=sflag, size = 0x8, scoped, tag = 'scoped memory for tpu_custom_call.1']
    #allocation5 [shape = 's32[2]{0}', space=sflag, size = 0x8, scoped, tag = 'scoped memory for tpu_custom_call.1']
    #allocation6 [shape = 'u8[8192]{0}', space=vmem, size = 0x2000, scoped, tag = 'input window, operand 1']
    #allocation7 [shape = 's32[2]{0}', space=sflag, size = 0x8, scoped, tag = 'scoped memory for tpu_custom_call.1']
    #allocation8 [shape = 'u8[512]{0}', space=vmem, size = 0x400, scoped, tag = 'output window, operand 0, single buffered']
    %7 = vsyncpa [#allocation4], 0
    %s8 = scalar_lea.sflag [#allocation4], 1
    %9 = vsyncpa %s8, 0
    %10 = vsyncpa [#allocation7], 0
    %s11 = scalar_lea.sflag [#allocation7], 1
    %12 = vsyncpa %s11, 0
    %13 = vsyncpa [#allocation5], 0
    loop: start=0, step=1, limit=6
    $region2: #{tpu_custom_call.1} parent=1 // loop_pre_header
      _
    $region3: #{tpu_custom_call.1} parent=1 // loop_header
      %s15 = sphi 0, %s19
      %p16 = scmp.ge.s32.totalorder %s15, 6
      %s22 = sphi 0, %s34
      %s23 = sphi 0, %s30
      %s24 = sphi 0, %s22
      %s25 = sphi 0, %s23
      %s26 = sphi 0, %s24
      %s27 = sphi 0, %s25
      %s45 = sphi 0, %s47
      %s48 = sphi 0, %s45
      %s49 = sphi 0, %s48
      %s65 = sphi 0, %s49
      %s79 = sphi 0, %s81
      %s82 = sphi 0, %s79
      %s83 = sphi 0, %s82
      %s99 = sphi 0, %s83
      %s105 = sphi 0, %s107
      %s108 = sphi 0, %s105
      %s109 = sphi 0, %s108
      %s125 = sphi 0, %s109
    $region4: #{tpu_custom_call.1} parent=1 // loop_header_branch
      %18 = sbr.rel (%p16) target = $region8
    $region5: #{tpu_custom_call.1} parent=1 // loop_body
      %s20 = ssub.s32 %s15, 1
      %s21 = ssub.s32 %s15, 2
      %s28 = sadd.s32 1, %s23
      %p29 = scmp.ge.s32.totalorder %s28, 4
      %s30 = scalar_select %p29, 0, %s28
      %s31 = sadd.s32 1, %s22
      %s32 = scalar_select %p29, %s31, %s22
      %p33 = scmp.ge.s32.totalorder %s32, 1
      %s34 = scalar_select %p33, 0, %s32
      %s35 = smul.u32 %s22, 4
      %s36 = sadd.s32 %s35, %s23
      %p37 = scmp.lt.s32.totalorder %s36, 3
      %s38 = scalar_select %p37, %s36, 3
      %s39 = smul.u32 %s34, 4
      %s40 = sadd.s32 %s39, %s30
      %p41 = scmp.lt.s32.totalorder %s40, 3
      %s42 = scalar_select %p41, %s40, 3
      %s43 = ssub.s32 %s38, %s42
      %p44 = scmp.eq.s32.totalorder %s43, 0
      %s46 = sadd.s32 %s45, 1
      %s47 = scalar_select %p44, %s45, %s46
      %p50 = pneg %p44
      %p51 = scmp.eq.s32.totalorder %s15, 3
      %p52 = por %p50, %p51
      %p53 = scmp.ne.s32.totalorder %s45, %s48
      %p54 = scmp.eq.s32.totalorder %s15, 0
      %p55 = por %p53, %p54
      %p56 = scmp.ne.s32.totalorder %s45, %s48
      %p57 = scmp.eq.s32.totalorder %s20, 3
      %p58 = por %p56, %p57
      %p59 = scmp.ne.s32.totalorder %s48, %s49
      %p60 = scmp.eq.s32.totalorder %s20, 0
      %p61 = por %p59, %p60
      %p62 = scmp.ne.s32.totalorder %s48, %s49
      %p63 = scmp.eq.s32.totalorder %s21, 3
      %p64 = por %p62, %p63
      %p66 = scmp.ne.s32.totalorder %s49, %s65
      %p67 = scmp.eq.s32.totalorder %s21, 0
      %p68 = por %p66, %p67
      %s69 = smul.u32 %s22, 4
      %s70 = sadd.s32 %s69, %s23
      %p71 = scmp.lt.s32.totalorder %s70, 3
      %s72 = scalar_select %p71, %s70, 3
      %s73 = smul.u32 %s34, 4
      %s74 = sadd.s32 %s73, %s30
      %p75 = scmp.lt.s32.totalorder %s74, 3
      %s76 = scalar_select %p75, %s74, 3
      %s77 = ssub.s32 %s72, %s76
      %p78 = scmp.eq.s32.totalorder %s77, 0
      %s80 = sadd.s32 %s79, 1
      %s81 = scalar_select %p78, %s79, %s80
      %p84 = pneg %p78
      %p85 = scmp.eq.s32.totalorder %s15, 3
      %p86 = por %p84, %p85
      %p87 = scmp.ne.s32.totalorder %s79, %s82
      %p88 = scmp.eq.s32.totalorder %s15, 0
      %p89 = por %p87, %p88
      %p90 = scmp.ne.s32.totalorder %s79, %s82
      %p91 = scmp.eq.s32.totalorder %s20, 3
      %p92 = por %p90, %p91
      %p93 = scmp.ne.s32.totalorder %s82, %s83
      %p94 = scmp.eq.s32.totalorder %s20, 0
      %p95 = por %p93, %p94
      %p96 = scmp.ne.s32.totalorder %s82, %s83
      %p97 = scmp.eq.s32.totalorder %s21, 3
      %p98 = por %p96, %p97
      %p100 = scmp.ne.s32.totalorder %s83, %s99
      %p101 = scmp.eq.s32.totalorder %s21, 0
      %p102 = por %p100, %p101
      %s103 = ssub.s32 %s22, %s34
      %p104 = scmp.eq.s32.totalorder %s103, 0
      %s106 = sadd.s32 %s105, 1
      %s107 = scalar_select %p104, %s105, %s106
      %p110 = pneg %p104
      %p111 = scmp.eq.s32.totalorder %s15, 3
      %p112 = por %p110, %p111
      %p113 = scmp.ne.s32.totalorder %s105, %s108
      %p114 = scmp.eq.s32.totalorder %s15, 0
      %p115 = por %p113, %p114
      %p116 = scmp.ne.s32.totalorder %s105, %s108
      %p117 = scmp.eq.s32.totalorder %s20, 3
      %p118 = por %p116, %p117
      %p119 = scmp.ne.s32.totalorder %s108, %s109
      %p120 = scmp.eq.s32.totalorder %s20, 0
      %p121 = por %p119, %p120
      %p122 = scmp.ne.s32.totalorder %s108, %s109
      %p123 = scmp.eq.s32.totalorder %s21, 3
      %p124 = por %p122, %p123
      %p126 = scmp.ne.s32.totalorder %s109, %s125
      %p127 = scmp.eq.s32.totalorder %s21, 0
      %p128 = por %p126, %p127
      %p129 = scmp.le.s32.totalorder 1, %s15
      %p130 = scmp.lt.s32.totalorder %s15, 5
      %p131 = pnand %p129, %p130
      %p132 = pneg %p131
      // Predicated region
      $region9: #{tpu_custom_call.1} parent=5 // pred_check
        _
      $region10: #{tpu_custom_call.1} parent=5 // pred_check_branch
        %134 = sbr.rel (%p131) target = $region12
      $region11: #{tpu_custom_call.1} parent=5 // pred_region
        %s135 = ssub.s32 %s15, 1
      $region12: #{tpu_custom_call.1} parent=5 // pred_fallthru
        _
      %p136 = scmp.lt.s32.totalorder %s15, 4
      // Predicated region
      $region13: #{tpu_custom_call.1} parent=5 // pred_check
        %p137 = pneg %p136
      $region14: #{tpu_custom_call.1} parent=5 // pred_check_branch
        %139 = sbr.rel (%p137) target = $region16
      $region15: #{tpu_custom_call.1} parent=5 // pred_region
        // Predicated region
        $region17: #{tpu_custom_call.1} parent=15 // pred_check
          %p140 = pneg %p55
        $region18: #{tpu_custom_call.1} parent=15 // pred_check_branch
          %142 = sbr.rel (%p140) target = $region20
        $region19: #{tpu_custom_call.1} parent=15 // pred_region
          %s143 = sand.u32 %s45, 1
          %s144 = scalar_lea.sflag [#allocation4], %s143
          %s145 = sand.u32 %s45, 1
          %s146 = smul.addr %s145, 8
          %s147 = scalar_lea.vmem [#allocation3], %s146
          %s148 = smul.u32 %s22, 4
          %s149 = sadd.s32 %s148, %s23
          %p150 = scmp.lt.s32.totalorder %s149, 3
          %s151 = scalar_select %p150, %s149, 3
          %s153 = ssub.s32 128, 128
          %154 = vsyncadd %s144, %s153
          %s155 = smul.addr %s151, 128
          %s156 = scalar_lea.hbm %s0, %s155
          %s158 = sshll.u32 %s147, 4
          %s159 = int_to_ptr.vmem [resolvable:$true] %s158
          %161 = dma.hbm_to_vmem [thread:$0]  %s156, 128, %s159, %s144
        $region20: #{tpu_custom_call.1} parent=15 // pred_fallthru
          _
        // Predicated region
        $region21: #{tpu_custom_call.1} parent=15 // pred_check
          %p162 = pneg %p89
        $region22: #{tpu_custom_call.1} parent=15 // pred_check_branch
          %164 = sbr.rel (%p162) target = $region24
        $region23: #{tpu_custom_call.1} parent=15 // pred_region
          %s165 = sand.u32 %s79, 1
          %s166 = scalar_lea.sflag [#allocation7], %s165
          %s167 = sand.u32 %s79, 1
          %s168 = smul.addr %s167, 8
          %s169 = scalar_lea.vmem [#allocation6], %s168
          %s170 = smul.u32 %s22, 4
          %s171 = sadd.s32 %s170, %s23
          %p172 = scmp.lt.s32.totalorder %s171, 3
          %s173 = scalar_select %p172, %s171, 3
          %s175 = ssub.s32 128, 128
          %176 = vsyncadd %s166, %s175
          %s177 = smul.addr %s173, 128
          %s178 = scalar_lea.hbm %s1, %s177
          %s180 = sshll.u32 %s169, 4
          %s181 = int_to_ptr.vmem [resolvable:$true] %s180
          %183 = dma.hbm_to_vmem [thread:$0]  %s178, 128, %s181, %s166
        $region24: #{tpu_custom_call.1} parent=15 // pred_fallthru
          _
      $region16: #{tpu_custom_call.1} parent=5 // pred_fallthru
        _
      %p184 = scmp.le.s32.totalorder 1, %s15
      %p185 = scmp.lt.s32.totalorder %s15, 5
      %p186 = pnand %p184, %p185
      %p187 = pneg %p186
      // Predicated region
      $region25: #{tpu_custom_call.1} parent=5 // pred_check
        _
      $region26: #{tpu_custom_call.1} parent=5 // pred_check_branch
        %189 = sbr.rel (%p186) target = $region28
      $region27: #{tpu_custom_call.1} parent=5 // pred_region
        %s190 = ssub.s32 %s15, 1
        %s191 = sand.u32 %s48, 1
        %s192 = scalar_lea.sflag [#allocation4], %s191
        %s193 = sand.u32 %s48, 1
        %s194 = smul.addr %s193, 8
        %s195 = scalar_lea.vmem [#allocation3], %s194
        // Predicated region
        $region29: #{tpu_custom_call.1} parent=27 // pred_check
          %p196 = pneg %p61
        $region30: #{tpu_custom_call.1} parent=27 // pred_check_branch
          %198 = sbr.rel (%p196) target = $region32
        $region31: #{tpu_custom_call.1} parent=27 // pred_region
          %199 = dma.done %s192, 128
        $region32: #{tpu_custom_call.1} parent=27 // pred_fallthru
          _
        %s200 = sand.u32 %s82, 1
        %s201 = scalar_lea.sflag [#allocation7], %s200
        %s202 = sand.u32 %s82, 1
        %s203 = smul.addr %s202, 8
        %s204 = scalar_lea.vmem [#allocation6], %s203
        // Predicated region
        $region33: #{tpu_custom_call.1} parent=27 // pred_check
          %p205 = pneg %p95
        $region34: #{tpu_custom_call.1} parent=27 // pred_check_branch
          %207 = sbr.rel (%p205) target = $region36
        $region35: #{tpu_custom_call.1} parent=27 // pred_region
          %208 = dma.done %s201, 128
        $region36: #{tpu_custom_call.1} parent=27 // pred_fallthru
          _
        %s209 = sand.u32 %s48, 1
        %s210 = scalar_lea.sflag [#allocation4], %s209
        %s211 = sand.u32 %s48, 1
        %s212 = smul.addr %s211, 8
        %s213 = scalar_lea.vmem [#allocation3], %s212
        %p214 = pneg %p61
        %p215 = pneg %p58
        %s216 = sand.u32 %s82, 1
        %s217 = scalar_lea.sflag [#allocation7], %s216
        %s218 = sand.u32 %s82, 1
        %s219 = smul.addr %s218, 8
        %s220 = scalar_lea.vmem [#allocation6], %s219
        %p221 = pneg %p95
        %p222 = pneg %p92
        %p223 = pneg %p121
        %p224 = pneg %p118
        %s225 = smul.u32 %s24, 4
        %s226 = sadd.s32 %s225, %s25
        %p227 = scmp.lt.s32.totalorder %s226, 3
        %s228 = scalar_select %p227, %s226, 3
        %s229 = smul.u32 %s24, 4
        %s230 = sadd.s32 %s229, %s25
        %p231 = scmp.lt.s32.totalorder %s230, 3
        %s232 = scalar_select %p231, %s230, 3
        %p233 = scmp.eq.s32.totalorder %s25, 0
        // Predicated region
        $region37: #{tpu_custom_call.1} parent=27 // pred_check
          %p234 = pneg %p233
        $region38: #{tpu_custom_call.1} parent=27 // pred_check_branch
          %236 = sbr.rel (%p234) target = $region40
        $region39: #{tpu_custom_call.1} parent=27 // pred_region
          %237 = vst [vmem:[#allocation2] sm:$0xff] 0.0
        $region40: #{tpu_custom_call.1} parent=27 // pred_fallthru
          _
        %v238 = vld [vmem:[%s195] sm:$0xff]
        %v239 = vld [vmem:[%s204] sm:$0xff]
        %v240 = vmul.f32 %v238, 0.5
        %v241 = vmul.f32 %v239, 0.5
        %242 = vmax.xlane.f32.xlu0 %v240
        %v243 = vpop.xlane.xlu0 %242
        %v244 = vsub.f32 %v240, %v243
        %v245 = vmul.f32 %v244, 1.442695
        %v246 = vpow.pop %v245
        %247 = vadd.xlane.f32.xlu0 %v246
        %v248 = vpop.xlane.xlu0 %247
        %v249 = vrcp.pop %v248
        %v250 = vmul.f32 %v246, %v249
        %v251 = vlog2.pop %v248
        %v252 = vmul.f32 %v251, 0.6931472
        %v253 = vsub.f32 %v244, %v252
        %254 = vmax.xlane.f32.xlu0 %v241
        %v255 = vpop.xlane.xlu0 %254
        %v256 = vsub.f32 %v241, %v255
        %v257 = vmul.f32 %v256, 1.442695
        %v258 = vpow.pop %v257
        %259 = vadd.xlane.f32.xlu0 %v258
        %v260 = vpop.xlane.xlu0 %259
        %v261 = vrcp.pop %v260
        %v262 = vmul.f32 %v258, %v261
        %v263 = vlog2.pop %v260
        %v264 = vmul.f32 %v263, 0.6931472
        %v265 = vsub.f32 %v256, %v264
        %v266 = vadd.f32 %v250, %v262
        %v267 = vmul.f32 %v266, 0.5
        %v268 = vmax.f32 %v267, 1e-30
        %v269 = vlog2.pop %v268
        %v270 = vmul.f32 %v269, 0.6931472
        %v271 = vmul.f32 %v270, 2.0
        %v272 = vsub.f32 %v271, %v253
        %v273 = vsub.f32 %v272, %v265
        %v274 = vmul.f32 %v267, %v273
        %v275 = vld [vmem:[#allocation2] sm:$0xff]
        %v276 = vadd.f32 %v274, 0.0
        %v277 = vadd.f32 %v275, %v276
        %278 = vst [vmem:[#allocation2] sm:$0xff] %v277
        %p279 = scmp.eq.s32.totalorder %s25, 3
        // Predicated region
        $region41: #{tpu_custom_call.1} parent=27 // pred_check
          %p280 = pneg %p279
        $region42: #{tpu_custom_call.1} parent=27 // pred_check_branch
          %282 = sbr.rel (%p280) target = $region44
        $region43: #{tpu_custom_call.1} parent=27 // pred_region
          %v283 = vld [vmem:[#allocation2] sm:$0xff]
          %284 = vadd.xlane.f32.xlu0 %v283
          %v285 = vpop.xlane.xlu0 %284
          %v286 = vrot.slane %v285, 4
          %v287 = vadd.f32 %v285, %v286
          %v288 = vrot.slane %v287, 2
          %v289 = vadd.f32 %v287, %v288
          %v290 = vrot.slane %v289, 1
          %v291 = vadd.f32 %v289, %v290
          %s292 = vtos %v291
          %v293 = vstv %s292
          %vm294 = vcmask 0
          %295 = vst.msk [vmem:[#allocation8] sm:$0x1] %vm294, %v293
        $region44: #{tpu_custom_call.1} parent=27 // pred_fallthru
          _
        // Predicated region
        $region45: #{tpu_custom_call.1} parent=27 // pred_check
          %p296 = pneg %p118
        $region46: #{tpu_custom_call.1} parent=27 // pred_check_branch
          %298 = sbr.rel (%p296) target = $region48
        $region47: #{tpu_custom_call.1} parent=27 // pred_region
          %s300 = ssub.s32 16, 16
          %301 = vsyncadd [#allocation5], %s300
          %s302 = smul.addr %s24, 16
          %s303 = scalar_lea.hbm %s2, %s302
          %s305 = sshll.u32 [#allocation8], 4
          %s306 = int_to_ptr.vmem [resolvable:$true] %s305
          %308 = dma.vmem_to_hbm [thread:$0]  %s306, 16, %s303, [#allocation5]
        $region48: #{tpu_custom_call.1} parent=27 // pred_fallthru
          _
        // Predicated region
        $region49: #{tpu_custom_call.1} parent=27 // pred_check
          %p309 = pneg %p118
        $region50: #{tpu_custom_call.1} parent=27 // pred_check_branch
          %311 = sbr.rel (%p309) target = $region52
        $region51: #{tpu_custom_call.1} parent=27 // pred_region
          %312 = dma.done [#allocation5], 16
        $region52: #{tpu_custom_call.1} parent=27 // pred_fallthru
          _
      $region28: #{tpu_custom_call.1} parent=5 // pred_fallthru
        _
      %p313 = scmp.le.s32.totalorder 2, %s15
      // Predicated region
      $region53: #{tpu_custom_call.1} parent=5 // pred_check
        %p314 = pneg %p313
      $region54: #{tpu_custom_call.1} parent=5 // pred_check_branch
        %316 = sbr.rel (%p314) target = $region56
      $region55: #{tpu_custom_call.1} parent=5 // pred_region
        %s317 = ssub.s32 %s15, 2
      $region56: #{tpu_custom_call.1} parent=5 // pred_fallthru
        _
    $region6: #{tpu_custom_call.1} parent=1 // loop_footer
      %s19 = sadd.s32 1, %s15
    $region7: #{tpu_custom_call.1} parent=1 // loop_footer_branch
      %14 = sbr.rel target = $region3
    $region8: #{tpu_custom_call.1} parent=1 // loop_exit
      _
    %318 = vsyncpa [#allocation4], 1
    %s319 = scalar_lea.sflag [#allocation4], 1
    %320 = vsyncpa %s319, 1
    %321 = vsyncpa [#allocation7], 1
    %s322 = scalar_lea.sflag [#allocation7], 1
    %323 = vsyncpa %s322, 1
    %324 = vsyncpa [#allocation5], 1
    %s325 = scalar_lea.sflag [#allocation5], 1
    %326 = vsyncpa %s325, 1

</llo_original>
